<compile_context>
chip_gen: v7x
topology: tpu7x:2x2x1
jax: 0.10.0
libtpu: 0.0.40
codegen_flags: <defaults>
</compile_context>

<pallas_src>
import numpy as np
import jax
import jax.numpy as jnp
from jax.experimental import pallas as pl
from jax.experimental.pallas import tpu as pltpu


# ---------------------------------------------------------------------------
# Host-side construction of the separable reflect+blur+stride operators.
# ---------------------------------------------------------------------------
def _reflect(i, n):
    if i < 0:
        return -i
    if i >= n:
        return 2 * n - 2 - i
    return i


def _blur_matrices(H, W):
    """B_h (Ho,H), B_w (W,Wo): reflect-pad(1) + [1,2,1]/4 blur + stride 2."""
    g = (0.25, 0.5, 0.25)
    Ho, Wo = (H + 1) // 2, (W + 1) // 2
    bh = np.zeros((Ho, H), np.float32)
    for i in range(Ho):
        for a in range(3):
            bh[i, _reflect(2 * i + a - 1, H)] += g[a]
    bw = np.zeros((W, Wo), np.float32)
    for j in range(Wo):
        for b in range(3):
            bw[_reflect(2 * j + b - 1, W), j] += g[b]
    return bh, bw


# ---------------------------------------------------------------------------
# Kernels.
# ---------------------------------------------------------------------------
def _fused_kernel(m_ref, x_ref, o_ref):
    # m_ref: (H*W, Ho*Wo) resident; x_ref: (1, cb, H*W); o_ref: (1, cb, Ho*Wo).
    x = x_ref[0].astype(m_ref.dtype)
    o_ref[0] = jnp.dot(x, m_ref[...],
                       preferred_element_type=jnp.float32).astype(o_ref.dtype)


def _separable_kernel(bh_ref, bw_ref, x_ref, o_ref):
    # bh_ref: (Ho,H), bw_ref: (W,Wo) resident; x_ref: (1,cb,H,W);
    # o_ref: (1,cb,Ho,Wo).  Two batched matmuls, no per-channel Python loop.
    cb = x_ref.shape[1]
    x = x_ref[0].astype(bw_ref.dtype)                            # (cb, H, W)
    bw_b = jnp.broadcast_to(bw_ref[...], (cb,) + bw_ref.shape)   # (cb, W, Wo)
    bh_b = jnp.broadcast_to(bh_ref[...], (cb,) + bh_ref.shape)   # (cb, Ho, H)
    t = jnp.einsum('chw,cwk->chk', x, bw_b,
                   preferred_element_type=jnp.float32).astype(x.dtype)
    y = jnp.einsum('coh,chk->cok', bh_b, t,
                   preferred_element_type=jnp.float32)
    o_ref[0] = y.astype(o_ref.dtype)


# ---------------------------------------------------------------------------
# Channel-block selection (ragged; padded-VMEM-footprint budget; v7x 2-TC aware).
# ---------------------------------------------------------------------------
_VMEM_LIMIT = 32 * 1024 * 1024        # explicit scoped-VMEM request
_VMEM_BUDGET = 20 * 1024 * 1024       # soft budget for blocks + residents


def _align_up(v, m):
    return -(-v // m) * m


def _pick_cb(C, N, candidates, block_bytes, budget):
    feasible = [c for c in candidates if block_bytes(c) <= budget]
    if not feasible:
        feasible = [min(candidates)]
    steps = lambda cb: N * (-(-C // cb))
    # Prefer: (a) >=2 grid steps (keeps both v7x TensorCores busy),
    # (b) an even number of steps, (c) the largest channel block.
    return max(feasible, key=lambda cb: (steps(cb) >= 2, steps(cb) % 2 == 0, cb))


# ---------------------------------------------------------------------------
# Public wrapper.
# ---------------------------------------------------------------------------
def anti_alias_downsample(x, *, force_separable=False):
    """x: (N, C, H, W). Returns (N, C, ceil(H/2), ceil(W/2))."""
    N, C, H, W = x.shape
    Ho, Wo = (H + 1) // 2, (W + 1) // 2
    bh_np, bw_np = _blur_matrices(H, W)

    # bf16 inputs stay bf16 on the MXU (f32 accumulation); else compute in f32.
    cdtype = jnp.bfloat16 if x.dtype == jnp.bfloat16 else jnp.float32
    isz = np.dtype(x.dtype).itemsize
    csz = np.dtype(cdtype).itemsize
    sub = 8 * (4 // isz) if isz in (1, 2, 4) else 8   # sublane packing of x dtype
    sub_c = 8 * (4 // csz)

    bytes_io = N * C * (H * W + Ho * Wo) * isz
    use_fused = (not force_separable) and (H * W <= 1024)

    if use_fused:
        HW, HoWo = H * W, Ho * Wo
        m = jnp.asarray(np.kron(bh_np.T, bw_np), dtype=cdtype)   # (HW, HoWo)

        def block_bytes(cb):
            cbp = _align_up(cb, sub)
            in_b = cbp * _align_up(HW, 128) * isz
            out_b = cbp * _align_up(HoWo, 128) * isz
            acc_b = _align_up(cb, 8) * _align_up(HoWo, 128) * 4
            m_b = _align_up(HW, sub_c) * _align_up(HoWo, 128) * csz
            return 2 * in_b + 2 * out_b + acc_b + 2 * m_b

        # cb is the block's second-minor dim: keep it a multiple of the
        # sublane packing, or the full channel dim.
        cands = sorted(set(range(sub, C, sub)) | {C})
        cb = _pick_cb(C, N, cands, block_bytes, _VMEM_BUDGET)
        num_cblk = -(-C // cb)
        flops = 2 * N * C * HW * HoWo

        out_flat = pl.pallas_call(
            _fused_kernel,
            out_shape=jax.ShapeDtypeStruct((N, C, HoWo), x.dtype),
            grid=(N, num_cblk),
            in_specs=[
                pl.BlockSpec((HW, HoWo), lambda n, c: (0, 0)),    # resident M
                pl.BlockSpec((1, cb, HW), lambda n, c: (n, c, 0)),
            ],
            out_specs=pl.BlockSpec((1, cb, HoWo), lambda n, c: (n, c, 0)),
            compiler_params=pltpu.CompilerParams(
                dimension_semantics=("parallel", "parallel"),
                vmem_limit_bytes=_VMEM_LIMIT),
            cost_estimate=pl.CostEstimate(
                flops=flops, transcendentals=0, bytes_accessed=bytes_io),
        )(m, x.reshape(N, C, HW))
        return out_flat.reshape(N, C, Ho, Wo)

    # ------------------------- separable path (large spatial) ---------------
    bh = jnp.asarray(bh_np, dtype=cdtype)
    bw = jnp.asarray(bw_np, dtype=cdtype)

    def block_bytes(cb):
        per_in = _align_up(H, sub) * _align_up(W, 128) * isz
        per_out = _align_up(Ho, sub) * _align_up(Wo, 128) * isz
        per_t32 = _align_up(H, 8) * _align_up(Wo, 128) * 4
        per_t = _align_up(H, sub_c) * _align_up(Wo, 128) * csz
        per_bw = _align_up(W, sub_c) * _align_up(Wo, 128) * csz
        per_bh = _align_up(Ho, sub_c) * _align_up(H, 128) * csz
        consts = 2 * (_align_up(Ho, sub_c) * _align_up(H, 128)
                      + _align_up(W, sub_c) * _align_up(Wo, 128)) * csz
        return cb * (2 * per_in + 2 * per_out + per_t32 + per_t
                     + per_bw + per_bh) + consts

    cb = _pick_cb(C, N, list(range(1, C + 1)), block_bytes, _VMEM_BUDGET)
    num_cblk = -(-C // cb)
    flops = 2 * N * C * (H * W * Wo + Ho * H * Wo)

    # TODO(synk): for planes too large to fit even at cb=1, add an H grid axis
    # with a 2-row reflect halo instead of loading the full plane.
    return pl.pallas_call(
        _separable_kernel,
        out_shape=jax.ShapeDtypeStruct((N, C, Ho, Wo), x.dtype),
        grid=(N, num_cblk),
        in_specs=[
            pl.BlockSpec((Ho, H), lambda n, c: (0, 0)),           # resident
            pl.BlockSpec((W, Wo), lambda n, c: (0, 0)),           # resident
            pl.BlockSpec((1, cb, H, W), lambda n, c: (n, c, 0, 0)),
        ],
        out_specs=pl.BlockSpec((1, cb, Ho, Wo), lambda n, c: (n, c, 0, 0)),
        compiler_params=pltpu.CompilerParams(
            dimension_semantics=("parallel", "parallel"),
            vmem_limit_bytes=_VMEM_LIMIT),
        cost_estimate=pl.CostEstimate(
            flops=flops, transcendentals=0, bytes_accessed=bytes_io),
    )(bh, bw, x)


# ---------------------------------------------------------------------------
# Pure-JAX reference (matches the PyTorch module).
# ---------------------------------------------------------------------------
def _reference(x):
    C = x.shape[1]
    f = jnp.array([1.0, 2.0, 1.0], dtype=jnp.float32)
    f2 = f[:, None] * f[None, :]
    f2 = f2 / jnp.sum(f2)
    filt = jnp.broadcast_to(f2[None, None, :, :], (C, 1, 3, 3)).astype(x.dtype)
    xp = jnp.pad(x, ((0, 0), (0, 0), (1, 1), (1, 1)), mode="reflect")
    return jax.lax.conv_general_dilated(
        xp, filt, window_strides=(2, 2), padding="VALID",
        dimension_numbers=("NCHW", "OIHW", "NCHW"),
        feature_group_count=C)


if __name__ == "__main__":
    k0, k1 = jax.random.split(jax.random.PRNGKey(0))

    # Primary check: fused (kron) path at the module's reference shape.
    x = jax.random.normal(k0, (2, 4, 16, 16), dtype=jnp.float32)
    out = jax.block_until_ready(anti_alias_downsample(x))
    ref = jax.block_until_ready(_reference(x))
    assert out.shape == (2, 4, 8, 8), out.shape
    assert jnp.allclose(out, ref, rtol=1e-4, atol=1e-4), float(
        jnp.max(jnp.abs(out - ref)))

    # Secondary check: separable (large-spatial) path with ragged channel blocks.
    x2 = jax.random.normal(k1, (1, 8, 20, 20), dtype=jnp.float32)
    out2 = jax.block_until_ready(anti_alias_downsample(x2, force_separable=True))
    ref2 = jax.block_until_ready(_reference(x2))
    assert out2.shape == (1, 8, 10, 10), out2.shape
    assert jnp.allclose(out2, ref2, rtol=1e-4, atol=1e-4), float(
        jnp.max(jnp.abs(out2 - ref2)))

    print("KERNEL_OK")
</pallas_src>

<mosaic_0001>
module attributes {stable_mosaic.version = 11 : i64} {
  func.func @_fused_kernel(%arg0: i32, %arg1: i32, %arg2: memref<256x64xf32, #tpu.memory_space<vmem>>, %arg3: memref<1x4x256xf32, #tpu.memory_space<vmem>>, %arg4: memref<1x4x64xf32, #tpu.memory_space<vmem>>) attributes {dimension_semantics = [#tpu.dimension_semantics<parallel>, #tpu.dimension_semantics<parallel>], iteration_bounds = array<i64: 2, 1>, scalar_prefetch = 0 : i64, scratch_operands = 0 : i64, tpu.core_type = #tpu.core_type<tc>, window_params = [{pipeline_mode = #tpu.pipeline_mode<synchronous>, transform_indices = @transform_0, window_bounds = array<i64: 256, 64>}, {transform_indices = @transform_1, window_bounds = array<i64: 1, 4, 256>}, {transform_indices = @transform_2, window_bounds = array<i64: 1, 4, 64>}]} {
    %c0 = arith.constant 0 : index
    %c0_0 = arith.constant 0 : index
    %c0_1 = arith.constant 0 : index
    %0 = vector.load %arg3[%c0, %c0_0, %c0_1] : memref<1x4x256xf32, #tpu.memory_space<vmem>>, vector<1x4x256xf32>
    %1 = vector.shape_cast %0 : vector<1x4x256xf32> to vector<4x256xf32>
    %c0_2 = arith.constant 0 : index
    %c0_3 = arith.constant 0 : index
    %2 = vector.load %arg2[%c0_2, %c0_3] : memref<256x64xf32, #tpu.memory_space<vmem>>, vector<256x64xf32>
    %cst = arith.constant dense<0.000000e+00> : vector<4x64xf32>
    %3 = tpu.matmul %1, %2, %cst {dimension_numbers = #tpu.dot_dimension_numbers<[1], [0], [0], [1], [0, 0, 1, 1], [], []>} : vector<4x256xf32>, vector<256x64xf32>, vector<4x64xf32> -> vector<4x64xf32>
    %c0_4 = arith.constant 0 : index
    %c0_5 = arith.constant 0 : index
    %c0_6 = arith.constant 0 : index
    %4 = vector.load %arg4[%c0_4, %c0_5, %c0_6] : memref<1x4x64xf32, #tpu.memory_space<vmem>>, vector<1x4x64xf32>
    %5 = vector.shape_cast %4 : vector<1x4x64xf32> to vector<4x64xf32>
    %6 = vector.shape_cast %3 : vector<4x64xf32> to vector<1x4x64xf32>
    tpu.vector_store %arg4[%c0_4, %c0_5, %c0_6], %6 {strides = array<i32>} : memref<1x4x64xf32, #tpu.memory_space<vmem>>, vector<1x4x64xf32>,
    return
  }
  func.func @transform_0(%arg0: i32, %arg1: i32) -> (i32, i32) {
    %c0_i32 = arith.constant 0 : i32
    %c0_i32_0 = arith.constant 0 : i32
    %c0_i32_1 = arith.constant 0 : i32
    return %c0_i32, %c0_i32_0 : i32, i32
  }
  func.func @transform_1(%arg0: i32, %arg1: i32) -> (i32, i32, i32) {
    %c0_i32 = arith.constant 0 : i32
    %c0_i32_0 = arith.constant 0 : i32
    return %arg0, %arg1, %c0_i32 : i32, i32, i32
  }
  func.func @transform_2(%arg0: i32, %arg1: i32) -> (i32, i32, i32) {
    %c0_i32 = arith.constant 0 : i32
    %c0_i32_0 = arith.constant 0 : i32
    return %arg0, %arg1, %c0_i32 : i32, i32, i32
  }
}

</mosaic_0001>

<llo_original>
// kernel: tpu_custom_call.1
$region0: #{tpu_custom_call.1}
  #allocation0 [shape = 'u32[]', space=smem, size = 0x4, offset = 0x4, fixed_abs, tag = 'smem constant byte address 0x4 - core index']
  #allocation1 [shape = 'u32[144,128]{1,0:T(1,128)}', space=vmem, size = 0x12000, scoped, tag = 'internal scratch']
  %s0 = inlined_call_operand.vmem [shape: f32[256,64], index: 0, kind: input, shape index: {}]
  %s1 = inlined_call_operand.vmem [shape: f32[2,4,256], index: 1, kind: input, shape index: {}]
  %s2 = inlined_call_operand.hbm [shape: f32[2,4,64], index: 2, kind: output, shape index: {}]
  %s3 = sld [smem:[#allocation0]]
  $region41: #{tpu_custom_call.1} parent=0
    _
  %s5 = ssub.s32 1, %s3
  %s6 = scalar_select 0, %s5, %s3
  $region1: #{tpu_custom_call.1} parent=0
    #allocation2 [shape = 'u8[4096]{0}', space=vmem, size = 0x1000, scoped, tag = 'output window, operand 0']
    #allocation3 [shape = 's32[2]{0}', space=sflag, size = 0x8, scoped, tag = 'scoped memory for tpu_custom_call.1']
    %7 = vsyncpa [#allocation3], 0
    %s8 = scalar_lea.sflag [#allocation3], 1
    %9 = vsyncpa %s8, 0
    loop: start=0, step=1, limit=4
    $region2: #{tpu_custom_call.1} parent=1 // loop_pre_header
      _
    $region3: #{tpu_custom_call.1} parent=1 // loop_header
      %s11 = sphi 0, %s15
      %p12 = scmp.ge.s32.totalorder %s11, 4
      %s18 = sphi 0, %s30
      %s19 = sphi 0, %s26
      %s20 = sphi 0, %s18
      %s21 = sphi 0, %s19
      %s22 = sphi 0, %s20
      %s23 = sphi 0, %s21
      %s31 = sphi 0, %s31
      %s33 = sphi 0, %s31
      %s34 = sphi 0, %s33
      %s48 = sphi 0, %s34
      %s56 = sphi 0, %s58
      %s59 = sphi 0, %s56
      %s60 = sphi 0, %s59
      %s76 = sphi 0, %s60
      %s84 = sphi 0, %s86
      %s87 = sphi 0, %s84
      %s88 = sphi 0, %s87
      %s104 = sphi 0, %s88
    $region4: #{tpu_custom_call.1} parent=1 // loop_header_branch
      %14 = sbr.rel (%p12) target = $region8
    $region5: #{tpu_custom_call.1} parent=1 // loop_body
      %s16 = ssub.s32 %s11, 1
      %s17 = ssub.s32 %s11, 2
      %s24 = sadd.s32 1, %s19
      %p25 = scmp.ge.s32.totalorder %s24, 1
      %s26 = scalar_select %p25, 0, %s24
      %s27 = sadd.s32 1, %s18
      %s28 = scalar_select %p25, %s27, %s18
      %p29 = scmp.ge.s32.totalorder %s28, 2
      %s30 = scalar_select %p29, 0, %s28
      %s32 = sadd.s32 %s31, 1
      %p35 = scmp.eq.s32.totalorder %s11, 1
      %p36 = scmp.ne.s32.totalorder %s31, %s33
      %p37 = scmp.eq.s32.totalorder %s11, 0
      %p38 = por %p36, %p37
      %p39 = scmp.ne.s32.totalorder %s31, %s33
      %p40 = scmp.eq.s32.totalorder %s16, 1
      %p41 = por %p39, %p40
      %p42 = scmp.ne.s32.totalorder %s33, %s34
      %p43 = scmp.eq.s32.totalorder %s16, 0
      %p44 = por %p42, %p43
      %p45 = scmp.ne.s32.totalorder %s33, %s34
      %p46 = scmp.eq.s32.totalorder %s17, 1
      %p47 = por %p45, %p46
      %p49 = scmp.ne.s32.totalorder %s34, %s48
      %p50 = scmp.eq.s32.totalorder %s17, 0
      %p51 = por %p49, %p50
      %s52 = ssub.s32 %s18, %s30
      %s53 = ssub.s32 %s19, %s26
      %s54 = sor.u32 %s52, %s53
      %p55 = scmp.eq.s32.totalorder %s54, 0
      %s57 = sadd.s32 %s56, 1
      %s58 = scalar_select %p55, %s56, %s57
      %p61 = pneg %p55
      %p62 = scmp.eq.s32.totalorder %s11, 1
      %p63 = por %p61, %p62
      %p64 = scmp.ne.s32.totalorder %s56, %s59
      %p65 = scmp.eq.s32.totalorder %s11, 0
      %p66 = por %p64, %p65
      %p67 = scmp.ne.s32.totalorder %s56, %s59
      %p68 = scmp.eq.s32.totalorder %s16, 1
      %p69 = por %p67, %p68
      %p70 = scmp.ne.s32.totalorder %s59, %s60
      %p71 = scmp.eq.s32.totalorder %s16, 0
      %p72 = por %p70, %p71
      %p73 = scmp.ne.s32.totalorder %s59, %s60
      %p74 = scmp.eq.s32.totalorder %s17, 1
      %p75 = por %p73, %p74
      %p77 = scmp.ne.s32.totalorder %s60, %s76
      %p78 = scmp.eq.s32.totalorder %s17, 0
      %p79 = por %p77, %p78
      %s80 = ssub.s32 %s18, %s30
      %s81 = ssub.s32 %s19, %s26
      %s82 = sor.u32 %s80, %s81
      %p83 = scmp.eq.s32.totalorder %s82, 0
      %s85 = sadd.s32 %s84, 1
      %s86 = scalar_select %p83, %s84, %s85
      %p89 = pneg %p83
      %p90 = scmp.eq.s32.totalorder %s11, 1
      %p91 = por %p89, %p90
      %p92 = scmp.ne.s32.totalorder %s84, %s87
      %p93 = scmp.eq.s32.totalorder %s11, 0
      %p94 = por %p92, %p93
      %p95 = scmp.ne.s32.totalorder %s84, %s87
      %p96 = scmp.eq.s32.totalorder %s16, 1
      %p97 = por %p95, %p96
      %p98 = scmp.ne.s32.totalorder %s87, %s88
      %p99 = scmp.eq.s32.totalorder %s16, 0
      %p100 = por %p98, %p99
      %p101 = scmp.ne.s32.totalorder %s87, %s88
      %p102 = scmp.eq.s32.totalorder %s17, 1
      %p103 = por %p101, %p102
      %p105 = scmp.ne.s32.totalorder %s88, %s104
      %p106 = scmp.eq.s32.totalorder %s17, 0
      %p107 = por %p105, %p106
      %p108 = scmp.le.s32.totalorder 1, %s11
      %p109 = scmp.lt.s32.totalorder %s11, 3
      %p110 = pnand %p108, %p109
      %p111 = pneg %p110
      // Predicated region
      $region9: #{tpu_custom_call.1} parent=5 // pred_check
        _
      $region10: #{tpu_custom_call.1} parent=5 // pred_check_branch
        %113 = sbr.rel (%p110) target = $region12
      $region11: #{tpu_custom_call.1} parent=5 // pred_region
        %s114 = ssub.s32 %s11, 1
        // Predicated region
        $region13: #{tpu_custom_call.1} parent=11 // pred_check
          %p115 = pneg %p44
        $region14: #{tpu_custom_call.1} parent=11 // pred_check_branch
          %117 = sbr.rel (%p115) target = $region16
        $region15: #{tpu_custom_call.1} parent=11 // pred_region
          _
        $region16: #{tpu_custom_call.1} parent=11 // pred_fallthru
          _
      $region12: #{tpu_custom_call.1} parent=5 // pred_fallthru
        _
      %p118 = scmp.lt.s32.totalorder %s11, 2
      // Predicated region
      $region17: #{tpu_custom_call.1} parent=5 // pred_check
        %p119 = pneg %p118
      $region18: #{tpu_custom_call.1} parent=5 // pred_check_branch
        %121 = sbr.rel (%p119) target = $region20
      $region19: #{tpu_custom_call.1} parent=5 // pred_region
        // Predicated region
        $region21: #{tpu_custom_call.1} parent=19 // pred_check
          %p122 = pneg %p66
        $region22: #{tpu_custom_call.1} parent=19 // pred_check_branch
          %124 = sbr.rel (%p122) target = $region24
        $region23: #{tpu_custom_call.1} parent=19 // pred_region
          %p125 = scmp.lt.s32.totalorder %s18, 1
          %s126 = scalar_select %p125, %s18, 1
          %p127 = scmp.lt.s32.totalorder %s19, 0
          %s128 = scalar_select %p127, %s19, 0
          %s129 = smul.addr %s128, 2
          %s130 = smul.addr %s126, 2
          %s131 = sadd.s32 %s129, %s130
          %s132 = smul.addr %s131, 4
          %s133 = scalar_lea.vmem %s1, %s132
        $region24: #{tpu_custom_call.1} parent=19 // pred_fallthru
          _
      $region20: #{tpu_custom_call.1} parent=5 // pred_fallthru
        _
      %p134 = scmp.le.s32.totalorder 1, %s11
      %p135 = scmp.lt.s32.totalorder %s11, 3
      %p136 = pnand %p134, %p135
      %p137 = pneg %p136
      // Predicated region
      $region25: #{tpu_custom_call.1} parent=5 // pred_check
        _
      $region26: #{tpu_custom_call.1} parent=5 // pred_check_branch
        %139 = sbr.rel (%p136) target = $region28
      $region27: #{tpu_custom_call.1} parent=5 // pred_region
        %s140 = ssub.s32 %s11, 1
        %p141 = pneg %p44
        %p142 = pneg %p41
        %p143 = scmp.lt.s32.totalorder %s20, 1
        %s144 = scalar_select %p143, %s20, 1
        %p145 = scmp.lt.s32.totalorder %s21, 0
        %s146 = scalar_select %p145, %s21, 0
        %s147 = smul.addr %s146, 2
        %s148 = smul.addr %s144, 2
        %s149 = sadd.s32 %s147, %s148
        %s150 = smul.addr %s149, 4
        %s151 = scalar_lea.vmem %s1, %s150
        %p152 = pneg %p72
        %p153 = pneg %p69
        %p154 = pneg %p100
        %p155 = pneg %p97
        %s156 = sand.u32 %s87, 1
        %s157 = scalar_lea.sflag [#allocation3], %s156
        %s158 = sand.u32 %s87, 1
        %s159 = smul.addr %s158, 4
        %s160 = scalar_lea.vmem [#allocation2], %s159
        %p161 = scmp.lt.s32.totalorder %s20, 1
        %s162 = scalar_select %p161, %s20, 1
        %p163 = scmp.lt.s32.totalorder %s21, 0
        %s164 = scalar_select %p163, %s21, 0
        %s165 = smul.addr %s164, 2
        %s166 = smul.addr %s162, 2
        %s167 = sadd.s32 %s165, %s166
        %s168 = smul.addr %s167, 4
        %s169 = scalar_lea.vmem %s1, %s168
        %v170 = vld [vmem:[%s169] sm:$0xff]
        %v171 = vld [vmem:[%s0] sm:$0xff]
        %v172 = vld [vmem:[%s0 + $0x8] sm:$0xff]
        %v173 = vld [vmem:[%s0 + $0x10] sm:$0xff]
        %v174 = vld [vmem:[%s0 + $0x18] sm:$0xff]
        %v175 = vld [vmem:[%s0 + $0x20] sm:$0xff]
        %v176 = vld [vmem:[%s0 + $0x28] sm:$0xff]
        %v177 = vld [vmem:[%s0 + $0x30] sm:$0xff]
        %v178 = vld [vmem:[%s0 + $0x38] sm:$0xff]
        %v179 = vld [vmem:[%s0 + $0x40] sm:$0xff]
        %v180 = vld [vmem:[%s0 + $0x48] sm:$0xff]
        %v181 = vld [vmem:[%s0 + $0x50] sm:$0xff]
        %v182 = vld [vmem:[%s0 + $0x58] sm:$0xff]
        %v183 = vld [vmem:[%s0 + $0x60] sm:$0xff]
        %v184 = vld [vmem:[%s0 + $0x68] sm:$0xff]
        %v185 = vld [vmem:[%s0 + $0x70] sm:$0xff]
        %v186 = vld [vmem:[%s0 + $0x78] sm:$0xff]
        %v187 = vld [vmem:[%s0 + $0x80] sm:$0xff]
        %v188 = vld [vmem:[%s0 + $0x88] sm:$0xff]
        %v189 = vld [vmem:[%s0 + $0x90] sm:$0xff]
        %v190 = vld [vmem:[%s0 + $0x98] sm:$0xff]
        %v191 = vld [vmem:[%s0 + $0xa0] sm:$0xff]
        %v192 = vld [vmem:[%s0 + $0xa8] sm:$0xff]
        %v193 = vld [vmem:[%s0 + $0xb0] sm:$0xff]
        %v194 = vld [vmem:[%s0 + $0xb8] sm:$0xff]
        %v195 = vld [vmem:[%s0 + $0xc0] sm:$0xff]
        %v196 = vld [vmem:[%s0 + $0xc8] sm:$0xff]
        %v197 = vld [vmem:[%s0 + $0xd0] sm:$0xff]
        %v198 = vld [vmem:[%s0 + $0xd8] sm:$0xff]
        %v199 = vld [vmem:[%s0 + $0xe0] sm:$0xff]
        %v200 = vld [vmem:[%s0 + $0xe8] sm:$0xff]
        %v201 = vld [vmem:[%s0 + $0xf0] sm:$0xff]
        %v202 = vld [vmem:[%s0 + $0xf8] sm:$0xff]
        %v204 = vcombine.high %v170, %v170
        %206 = vmatprep.subr.mxu0 0.0
        %207 = vmatpush1.msra.mxu0 %v171
        %208 = vmatprep.subr.mxu0 0.0
        %209 = vmatpush1.msra.mxu0 %v172
        %210 = vmatprep.subr.mxu0 0.0
        %211 = vmatpush1.msra.mxu0 %v173
        %212 = vmatprep.subr.mxu0 0.0
        %213 = vmatpush1.msra.mxu0 %v174
        %214 = vmatprep.subr.mxu0 0.0
        %215 = vmatpush1.msra.mxu0 %v175
        %216 = vmatprep.subr.mxu0 0.0
        %217 = vmatpush1.msra.mxu0 %v176
        %218 = vmatprep.subr.mxu0 0.0
        %219 = vmatpush1.msra.mxu0 %v177
        %220 = vmatprep.subr.mxu0 0.0
        %221 = vmatpush1.msra.mxu0 %v178
        %222 = vmatprep.subr.mxu0 0.0
        %223 = vmatpush1.msra.mxu0 %v179
        %224 = vmatprep.subr.mxu0 0.0
        %225 = vmatpush1.msra.mxu0 %v180
        %226 = vmatprep.subr.mxu0 0.0
        %227 = vmatpush1.msra.mxu0 %v181
        %228 = vmatprep.subr.mxu0 0.0
        %229 = vmatpush1.msra.mxu0 %v182
        %230 = vmatprep.subr.mxu0 0.0
        %231 = vmatpush1.msra.mxu0 %v183
        %232 = vmatprep.subr.mxu0 0.0
        %233 = vmatpush1.msra.mxu0 %v184
        %234 = vmatprep.subr.mxu0 0.0
        %235 = vmatpush1.msra.mxu0 %v185
        %236 = vmatprep.subr.mxu0 0.0
        %237 = vmatpush1.msra.mxu0 %v186
        %238 = vmatprep.subr.mxu0 0.0
        %239 = vmatpush1.msra.mxu0 %v187
        %240 = vmatprep.subr.mxu0 0.0
        %241 = vmatpush1.msra.mxu0 %v188
        %242 = vmatprep.subr.mxu0 0.0
        %243 = vmatpush1.msra.mxu0 %v189
        %244 = vmatprep.subr.mxu0 0.0
        %245 = vmatpush1.msra.mxu0 %v190
        %246 = vmatprep.subr.mxu0 0.0
        %247 = vmatpush1.msra.mxu0 %v191
        %248 = vmatprep.subr.mxu0 0.0
        %249 = vmatpush1.msra.mxu0 %v192
        %250 = vmatprep.subr.mxu0 0.0
        %251 = vmatpush1.msra.mxu0 %v193
        %252 = vmatprep.subr.mxu0 0.0
        %253 = vmatpush1.msra.mxu0 %v194
        %254 = vmatprep.subr.mxu0 0.0
        %255 = vmatpush1.msra.mxu0 %v195
        %256 = vmatprep.subr.mxu0 0.0
        %257 = vmatpush1.msra.mxu0 %v196
        %258 = vmatprep.subr.mxu0 0.0
        %259 = vmatpush1.msra.mxu0 %v197
        %260 = vmatprep.subr.mxu0 0.0
        %261 = vmatpush1.msra.mxu0 %v198
        %262 = vmatprep.subr.mxu0 0.0
        %263 = vmatpush1.msra.mxu0 %v199
        %264 = vmatprep.subr.mxu0 0.0
        %265 = vmatpush1.msra.mxu0 %v200
        %266 = vmatprep.subr.mxu0 0.0
        %267 = vmatpush1.msra.mxu0 %v201
        %268 = vmatprep.subr.mxu0 0.0
        %269 = vmatpush1.msra.mxu0 %v202
        %270 = vmatprep.mubr.f32.mxu0 %v204
        %271 = vmatmul.mubr.f32.gmra.mrb[0].mxu0 %v170
        %v272 = vpop.f32.mrb[0].mxu0
        %v273 = vadd.f32 0.0, %v272
        %v274 = vpop.f32.mrb[0].mxu0
        %275 = vdwg.mxu0
        %vm276 = vcmask 519168
        %277 = vst.msk [vmem:[%s160] sm:$0xf] %vm276, %v273
        %s278 = sand.u32 %s87, 1
        %s279 = scalar_lea.sflag [#allocation3], %s278
        %s280 = sand.u32 %s87, 1
        %s281 = smul.addr %s280, 4
        %s282 = scalar_lea.vmem [#allocation2], %s281
        // Predicated region
        $region29: #{tpu_custom_call.1} parent=27 // pred_check
          %p283 = pneg %p97
        $region30: #{tpu_custom_call.1} parent=27 // pred_check_branch
          %285 = sbr.rel (%p283) target = $region32
        $region31: #{tpu_custom_call.1} parent=27 // pred_region
          %s287 = ssub.s32 64, 64
          %288 = vsyncadd %s279, %s287
          %s289 = sadd.s32 %s21, %s20
          %s290 = smul.addr %s289, 64
          %s291 = scalar_lea.hbm %s2, %s290
          %s293 = sshll.u32 %s282, 4
          %s294 = int_to_ptr.vmem [resolvable:$true] %s293
          %296 = dma.vmem_to_hbm [thread:$0]  %s294, 64, %s291, %s279
        $region32: #{tpu_custom_call.1} parent=27 // pred_fallthru
          _
      $region28: #{tpu_custom_call.1} parent=5 // pred_fallthru
        _
      %p297 = scmp.le.s32.totalorder 2, %s11
      // Predicated region
      $region33: #{tpu_custom_call.1} parent=5 // pred_check
        %p298 = pneg %p297
      $region34: #{tpu_custom_call.1} parent=5 // pred_check_branch
        %300 = sbr.rel (%p298) target = $region36
      $region35: #{tpu_custom_call.1} parent=5 // pred_region
        %s301 = ssub.s32 %s11, 2
        // Predicated region
        $region37: #{tpu_custom_call.1} parent=35 // pred_check
          %p302 = pneg %p103
        $region38: #{tpu_custom_call.1} parent=35 // pred_check_branch
          %304 = sbr.rel (%p302) target = $region40
        $region39: #{tpu_custom_call.1} parent=35 // pred_region
          %s305 = sand.u32 %s88, 1
          %s306 = scalar_lea.sflag [#allocation3], %s305
          %s307 = sand.u32 %s88, 1
          %s308 = smul.addr %s307, 4
          %s309 = scalar_lea.vmem [#allocation2], %s308
          %310 = dma.done %s306, 64
        $region40: #{tpu_custom_call.1} parent=35 // pred_fallthru
          _
      $region36: #{tpu_custom_call.1} parent=5 // pred_fallthru
        _
    $region6: #{tpu_custom_call.1} parent=1 // loop_footer
      %s15 = sadd.s32 1, %s11
    $region7: #{tpu_custom_call.1} parent=1 // loop_footer_branch
      %10 = sbr.rel target = $region3
    $region8: #{tpu_custom_call.1} parent=1 // loop_exit
      _
    %311 = vsyncpa [#allocation3], 1
    %s312 = scalar_lea.sflag [#allocation3], 1
    %313 = vsyncpa %s312, 1

</llo_original>
